<compile_context>
chip_gen: v6e
topology: v6e:2x2x1
jax: 0.10.0
libtpu: 0.0.40
codegen_flags: <defaults>
</compile_context>

<pallas_src>
import jax
import jax.numpy as jnp
from jax.experimental import pallas as pl
from jax.experimental.pallas import tpu as pltpu

# Hyper-parameters mirroring NBeatsBlock(input_dim=16, theta_dim=8,
# hidden_dim=32, layers=4) at small demo sizes.
INPUT_DIM = 16
HIDDEN_DIM = 32
THETA_DIM = 8
LAYERS = 4

BATCH = 256          # demo batch (2 grid steps of TILE_B rows)
TILE_B = 128         # rows per grid step -> full MXU row occupancy
OUT_DIM = INPUT_DIM + 1   # fused [backcast | forecast] output width


def nbeats_block_kernel(x_ref, w0_ref, b0_ref, wh_ref, bh_ref,
                        wproj_ref, bproj_ref, out_ref):
    # fc_stack: Linear(input, hidden) + ReLU, then (LAYERS-1)x Linear(hidden, hidden) + ReLU.
    # Weight slices are indexed from the refs per layer (no up-front hoist).
    h = jnp.maximum(
        jnp.dot(x_ref[...], w0_ref[...], preferred_element_type=jnp.float32)
        + b0_ref[...],
        0.0)
    for l in range(LAYERS - 1):
        h = jnp.maximum(
            jnp.dot(h, wh_ref[l], preferred_element_type=jnp.float32)
            + bh_ref[l],
            0.0)
    # Fused tail: [backcast | forecast] = h @ [wtb@wback | wtf@wfore]
    #                                        + [btb@wback | btf@wfore]
    out_ref[...] = (
        jnp.dot(h, wproj_ref[...], preferred_element_type=jnp.float32)
        + bproj_ref[...]
    ).astype(out_ref.dtype)


def nbeats_block_forward(x, params, *, tile_b=TILE_B):
    """x: (B, INPUT_DIM) float32. Returns (backcast (B, INPUT_DIM), forecast (B, 1))."""
    w0, b0, wh, bh, wtb, btb, wtf, btf, wback, wfore = params
    b, d = x.shape
    assert d == INPUT_DIM

    # Algebraic pre-fusion of the projection tail (done once, outside the kernel).
    wproj = jnp.concatenate([wtb @ wback, wtf @ wfore], axis=1)   # (HIDDEN, INPUT_DIM + 1)
    bproj = jnp.concatenate([btb @ wback, btf @ wfore], axis=1)   # (1, INPUT_DIM + 1)

    # Pad batch to a multiple of the tile.
    bp = pl.cdiv(b, tile_b) * tile_b
    xp = x if bp == b else jnp.pad(x, ((0, bp - b), (0, 0)))

    out = pl.pallas_call(
        nbeats_block_kernel,
        out_shape=jax.ShapeDtypeStruct((bp, OUT_DIM), jnp.float32),
        grid=(bp // tile_b,),
        in_specs=[
            pl.BlockSpec((tile_b, INPUT_DIM), lambda i: (i, 0)),
            pl.BlockSpec((INPUT_DIM, HIDDEN_DIM), lambda i: (0, 0)),
            pl.BlockSpec((1, HIDDEN_DIM), lambda i: (0, 0)),
            pl.BlockSpec((LAYERS - 1, HIDDEN_DIM, HIDDEN_DIM), lambda i: (0, 0, 0)),
            pl.BlockSpec((LAYERS - 1, 1, HIDDEN_DIM), lambda i: (0, 0, 0)),
            pl.BlockSpec((HIDDEN_DIM, OUT_DIM), lambda i: (0, 0)),
            pl.BlockSpec((1, OUT_DIM), lambda i: (0, 0)),
        ],
        out_specs=pl.BlockSpec((tile_b, OUT_DIM), lambda i: (i, 0)),
        compiler_params=pltpu.CompilerParams(
            dimension_semantics=("parallel",)),
    )(xp, w0, b0, wh, bh, wproj, bproj)

    out = out[:b]
    backcast = out[:, :INPUT_DIM]
    forecast = out[:, INPUT_DIM:]
    return backcast, forecast


def init_params(key):
    """Deterministic parameter init. Weights stored as (in, out)."""
    keys = jax.random.split(key, 10)

    def rnd(shape, k):
        return jax.random.normal(k, shape, jnp.float32) * 0.05

    w0 = rnd((INPUT_DIM, HIDDEN_DIM), keys[0])
    b0 = rnd((1, HIDDEN_DIM), keys[1])
    wh = rnd((LAYERS - 1, HIDDEN_DIM, HIDDEN_DIM), keys[2])
    bh = rnd((LAYERS - 1, 1, HIDDEN_DIM), keys[3])
    wtb = rnd((HIDDEN_DIM, THETA_DIM), keys[4])
    btb = rnd((1, THETA_DIM), keys[5])
    wtf = rnd((HIDDEN_DIM, THETA_DIM), keys[6])
    btf = rnd((1, THETA_DIM), keys[7])
    wback = rnd((THETA_DIM, INPUT_DIM), keys[8])
    wfore = rnd((THETA_DIM, 1), keys[9])
    return (w0, b0, wh, bh, wtb, btb, wtf, btf, wback, wfore)


def nbeats_block_reference(x, params):
    """Pure-JAX reference mirroring the PyTorch NBeatsBlock.forward exactly."""
    w0, b0, wh, bh, wtb, btb, wtf, btf, wback, wfore = params
    h = jax.nn.relu(x @ w0 + b0)
    for l in range(LAYERS - 1):
        h = jax.nn.relu(h @ wh[l] + bh[l])
    theta_b = h @ wtb + btb
    theta_f = h @ wtf + btf
    backcast = theta_b @ wback            # backcast_proj (no bias)
    forecast = theta_f @ wfore            # forecast_proj (no bias)
    return backcast, forecast


if __name__ == "__main__":
    key = jax.random.PRNGKey(0)
    kx, kp = jax.random.split(key)
    x = jax.random.normal(kx, (BATCH, INPUT_DIM), jnp.float32)
    params = init_params(kp)

    backcast, forecast = nbeats_block_forward(x, params)
    backcast = jax.block_until_ready(backcast)
    forecast = jax.block_until_ready(forecast)

    ref_b, ref_f = nbeats_block_reference(x, params)
    assert backcast.shape == (BATCH, INPUT_DIM)
    assert forecast.shape == (BATCH, 1)
    assert jnp.allclose(backcast, ref_b, atol=1e-4, rtol=1e-4)
    assert jnp.allclose(forecast, ref_f, atol=1e-4, rtol=1e-4)
    print("KERNEL_OK")
</pallas_src>

<mosaic_0001>
module attributes {stable_mosaic.version = 11 : i64} {
  func.func @nbeats_block_kernel(%arg0: i32, %arg1: memref<128x16xf32, #tpu.memory_space<vmem>>, %arg2: memref<16x32xf32, #tpu.memory_space<vmem>>, %arg3: memref<1x32xf32, #tpu.memory_space<vmem>>, %arg4: memref<3x32x32xf32, #tpu.memory_space<vmem>>, %arg5: memref<3x1x32xf32, #tpu.memory_space<vmem>>, %arg6: memref<32x17xf32, #tpu.memory_space<vmem>>, %arg7: memref<1x17xf32, #tpu.memory_space<vmem>>, %arg8: memref<128x17xf32, #tpu.memory_space<vmem>>) attributes {dimension_semantics = [#tpu.dimension_semantics<parallel>], iteration_bounds = array<i64: 2>, scalar_prefetch = 0 : i64, scratch_operands = 0 : i64, tpu.core_type = #tpu.core_type<tc>, window_params = [{transform_indices = @transform_0, window_bounds = array<i64: 128, 16>}, {pipeline_mode = #tpu.pipeline_mode<synchronous>, transform_indices = @transform_1, window_bounds = array<i64: 16, 32>}, {pipeline_mode = #tpu.pipeline_mode<synchronous>, transform_indices = @transform_2, window_bounds = array<i64: 1, 32>}, {pipeline_mode = #tpu.pipeline_mode<synchronous>, transform_indices = @transform_3, window_bounds = array<i64: 3, 32, 32>}, {pipeline_mode = #tpu.pipeline_mode<synchronous>, transform_indices = @transform_4, window_bounds = array<i64: 3, 1, 32>}, {pipeline_mode = #tpu.pipeline_mode<synchronous>, transform_indices = @transform_5, window_bounds = array<i64: 32, 17>}, {pipeline_mode = #tpu.pipeline_mode<synchronous>, transform_indices = @transform_6, window_bounds = array<i64: 1, 17>}, {transform_indices = @transform_7, window_bounds = array<i64: 128, 17>}]} {
    %c0 = arith.constant 0 : index
    %c0_0 = arith.constant 0 : index
    %0 = vector.load %arg1[%c0, %c0_0] : memref<128x16xf32, #tpu.memory_space<vmem>>, vector<128x16xf32>
    %c0_1 = arith.constant 0 : index
    %c0_2 = arith.constant 0 : index
    %1 = vector.load %arg2[%c0_1, %c0_2] : memref<16x32xf32, #tpu.memory_space<vmem>>, vector<16x32xf32>
    %cst = arith.constant dense<0.000000e+00> : vector<128x32xf32>
    %2 = tpu.matmul %0, %1, %cst {dimension_numbers = #tpu.dot_dimension_numbers<[1], [0], [0], [1], [0, 0, 1, 1], [], []>} : vector<128x16xf32>, vector<16x32xf32>, vector<128x32xf32> -> vector<128x32xf32>
    %c0_3 = arith.constant 0 : index
    %c0_4 = arith.constant 0 : index
    %3 = vector.load %arg3[%c0_3, %c0_4] : memref<1x32xf32, #tpu.memory_space<vmem>>, vector<1x32xf32>
    %4 = vector.broadcast %3 : vector<1x32xf32> to vector<128x32xf32>
    %5 = arith.addf %2, %4 : vector<128x32xf32>
    %cst_5 = arith.constant 0.000000e+00 : f32
    %6 = vector.broadcast %cst_5 : f32 to vector<128x32xf32>
    %7 = arith.maximumf %5, %6 : vector<128x32xf32>
    %c0_6 = arith.constant 0 : index
    %c0_7 = arith.constant 0 : index
    %c0_8 = arith.constant 0 : index
    %8 = vector.load %arg4[%c0_6, %c0_7, %c0_8] : memref<3x32x32xf32, #tpu.memory_space<vmem>>, vector<1x32x32xf32>
    %9 = vector.shape_cast %8 : vector<1x32x32xf32> to vector<32x32xf32>
    %cst_9 = arith.constant dense<0.000000e+00> : vector<128x32xf32>
    %10 = tpu.matmul %7, %9, %cst_9 {dimension_numbers = #tpu.dot_dimension_numbers<[1], [0], [0], [1], [0, 0, 1, 1], [], []>} : vector<128x32xf32>, vector<32x32xf32>, vector<128x32xf32> -> vector<128x32xf32>
    %c0_10 = arith.constant 0 : index
    %c0_11 = arith.constant 0 : index
    %c0_12 = arith.constant 0 : index
    %11 = vector.load %arg5[%c0_10, %c0_11, %c0_12] : memref<3x1x32xf32, #tpu.memory_space<vmem>>, vector<1x1x32xf32>
    %12 = vector.shape_cast %11 : vector<1x1x32xf32> to vector<1x32xf32>
    %13 = vector.broadcast %12 : vector<1x32xf32> to vector<128x32xf32>
    %14 = arith.addf %10, %13 : vector<128x32xf32>
    %cst_13 = arith.constant 0.000000e+00 : f32
    %15 = vector.broadcast %cst_13 : f32 to vector<128x32xf32>
    %16 = arith.maximumf %14, %15 : vector<128x32xf32>
    %c1 = arith.constant 1 : index
    %c0_14 = arith.constant 0 : index
    %c0_15 = arith.constant 0 : index
    %17 = vector.load %arg4[%c1, %c0_14, %c0_15] : memref<3x32x32xf32, #tpu.memory_space<vmem>>, vector<1x32x32xf32>
    %18 = vector.shape_cast %17 : vector<1x32x32xf32> to vector<32x32xf32>
    %cst_16 = arith.constant dense<0.000000e+00> : vector<128x32xf32>
    %19 = tpu.matmul %16, %18, %cst_16 {dimension_numbers = #tpu.dot_dimension_numbers<[1], [0], [0], [1], [0, 0, 1, 1], [], []>} : vector<128x32xf32>, vector<32x32xf32>, vector<128x32xf32> -> vector<128x32xf32>
    %c1_17 = arith.constant 1 : index
    %c0_18 = arith.constant 0 : index
    %c0_19 = arith.constant 0 : index
    %20 = vector.load %arg5[%c1_17, %c0_18, %c0_19] : memref<3x1x32xf32, #tpu.memory_space<vmem>>, vector<1x1x32xf32>
    %21 = vector.shape_cast %20 : vector<1x1x32xf32> to vector<1x32xf32>
    %22 = vector.broadcast %21 : vector<1x32xf32> to vector<128x32xf32>
    %23 = arith.addf %19, %22 : vector<128x32xf32>
    %cst_20 = arith.constant 0.000000e+00 : f32
    %24 = vector.broadcast %cst_20 : f32 to vector<128x32xf32>
    %25 = arith.maximumf %23, %24 : vector<128x32xf32>
    %c2 = arith.constant 2 : index
    %c0_21 = arith.constant 0 : index
    %c0_22 = arith.constant 0 : index
    %26 = vector.load %arg4[%c2, %c0_21, %c0_22] : memref<3x32x32xf32, #tpu.memory_space<vmem>>, vector<1x32x32xf32>
    %27 = vector.shape_cast %26 : vector<1x32x32xf32> to vector<32x32xf32>
    %cst_23 = arith.constant dense<0.000000e+00> : vector<128x32xf32>
    %28 = tpu.matmul %25, %27, %cst_23 {dimension_numbers = #tpu.dot_dimension_numbers<[1], [0], [0], [1], [0, 0, 1, 1], [], []>} : vector<128x32xf32>, vector<32x32xf32>, vector<128x32xf32> -> vector<128x32xf32>
    %c2_24 = arith.constant 2 : index
    %c0_25 = arith.constant 0 : index
    %c0_26 = arith.constant 0 : index
    %29 = vector.load %arg5[%c2_24, %c0_25, %c0_26] : memref<3x1x32xf32, #tpu.memory_space<vmem>>, vector<1x1x32xf32>
    %30 = vector.shape_cast %29 : vector<1x1x32xf32> to vector<1x32xf32>
    %31 = vector.broadcast %30 : vector<1x32xf32> to vector<128x32xf32>
    %32 = arith.addf %28, %31 : vector<128x32xf32>
    %cst_27 = arith.constant 0.000000e+00 : f32
    %33 = vector.broadcast %cst_27 : f32 to vector<128x32xf32>
    %34 = arith.maximumf %32, %33 : vector<128x32xf32>
    %c0_28 = arith.constant 0 : index
    %c0_29 = arith.constant 0 : index
    %35 = vector.load %arg6[%c0_28, %c0_29] : memref<32x17xf32, #tpu.memory_space<vmem>>, vector<32x17xf32>
    %cst_30 = arith.constant dense<0.000000e+00> : vector<128x17xf32>
    %36 = tpu.matmul %34, %35, %cst_30 {dimension_numbers = #tpu.dot_dimension_numbers<[1], [0], [0], [1], [0, 0, 1, 1], [], []>} : vector<128x32xf32>, vector<32x17xf32>, vector<128x17xf32> -> vector<128x17xf32>
    %c0_31 = arith.constant 0 : index
    %c0_32 = arith.constant 0 : index
    %37 = vector.load %arg7[%c0_31, %c0_32] : memref<1x17xf32, #tpu.memory_space<vmem>>, vector<1x17xf32>
    %38 = vector.broadcast %37 : vector<1x17xf32> to vector<128x17xf32>
    %39 = arith.addf %36, %38 : vector<128x17xf32>
    %c0_33 = arith.constant 0 : index
    %c0_34 = arith.constant 0 : index
    %40 = vector.load %arg8[%c0_33, %c0_34] : memref<128x17xf32, #tpu.memory_space<vmem>>, vector<128x17xf32>
    tpu.vector_store %arg8[%c0_33, %c0_34], %39 {strides = array<i32>} : memref<128x17xf32, #tpu.memory_space<vmem>>, vector<128x17xf32>,
    return
  }
  func.func @transform_0(%arg0: i32) -> (i32, i32) {
    %c0_i32 = arith.constant 0 : i32
    %c0_i32_0 = arith.constant 0 : i32
    return %arg0, %c0_i32 : i32, i32
  }
  func.func @transform_1(%arg0: i32) -> (i32, i32) {
    %c0_i32 = arith.constant 0 : i32
    %c0_i32_0 = arith.constant 0 : i32
    %c0_i32_1 = arith.constant 0 : i32
    return %c0_i32, %c0_i32_0 : i32, i32
  }
  func.func @transform_2(%arg0: i32) -> (i32, i32) {
    %c0_i32 = arith.constant 0 : i32
    %c0_i32_0 = arith.constant 0 : i32
    %c0_i32_1 = arith.constant 0 : i32
    return %c0_i32, %c0_i32_0 : i32, i32
  }
  func.func @transform_3(%arg0: i32) -> (i32, i32, i32) {
    %c0_i32 = arith.constant 0 : i32
    %c0_i32_0 = arith.constant 0 : i32
    %c0_i32_1 = arith.constant 0 : i32
    %c0_i32_2 = arith.constant 0 : i32
    return %c0_i32, %c0_i32_0, %c0_i32_1 : i32, i32, i32
  }
  func.func @transform_4(%arg0: i32) -> (i32, i32, i32) {
    %c0_i32 = arith.constant 0 : i32
    %c0_i32_0 = arith.constant 0 : i32
    %c0_i32_1 = arith.constant 0 : i32
    %c0_i32_2 = arith.constant 0 : i32
    return %c0_i32, %c0_i32_0, %c0_i32_1 : i32, i32, i32
  }
  func.func @transform_5(%arg0: i32) -> (i32, i32) {
    %c0_i32 = arith.constant 0 : i32
    %c0_i32_0 = arith.constant 0 : i32
    %c0_i32_1 = arith.constant 0 : i32
    return %c0_i32, %c0_i32_0 : i32, i32
  }
  func.func @transform_6(%arg0: i32) -> (i32, i32) {
    %c0_i32 = arith.constant 0 : i32
    %c0_i32_0 = arith.constant 0 : i32
    %c0_i32_1 = arith.constant 0 : i32
    return %c0_i32, %c0_i32_0 : i32, i32
  }
  func.func @transform_7(%arg0: i32) -> (i32, i32) {
    %c0_i32 = arith.constant 0 : i32
    %c0_i32_0 = arith.constant 0 : i32
    return %arg0, %c0_i32 : i32, i32
  }
}

</mosaic_0001>

<llo_original>
// kernel: tpu_custom_call.1
$region0: #{tpu_custom_call.1}
  #allocation0 [shape = 'u32[]', space=smem, size = 0x4, offset = 0x4, fixed_abs, tag = 'smem constant byte address 0x4 - core index']
  #allocation1 [shape = 'u32[144,128]{1,0:T(1,128)}', space=vmem, size = 0x12000, scoped, tag = 'internal scratch']
  %s0 = inlined_call_operand.vmem [shape: f32[256,16], index: 0, kind: input, shape index: {}]
  %s1 = inlined_call_operand.vmem [shape: f32[16,32], index: 1, kind: input, shape index: {}]
  %s2 = inlined_call_operand.vmem [shape: f32[1,32], index: 2, kind: input, shape index: {}]
  %s3 = inlined_call_operand.vmem [shape: f32[3,32,32], index: 3, kind: input, shape index: {}]
  %s4 = inlined_call_operand.vmem [shape: f32[3,1,32], index: 4, kind: input, shape index: {}]
  %s5 = inlined_call_operand.vmem [shape: f32[32,17], index: 5, kind: input, shape index: {}]
  %s6 = inlined_call_operand.vmem [shape: f32[1,17], index: 6, kind: input, shape index: {}]
  %s7 = inlined_call_operand.vmem [shape: f32[256,17], index: 7, kind: output, shape index: {}]
  %s8 = sld [smem:[#allocation0]]
  $region61: #{tpu_custom_call.1} parent=0
    _
  %s10 = ssub.s32 1, %s8
  %s11 = scalar_select 0, %s10, %s8
  loop: start=0, step=1, limit=4
  $region2: #{tpu_custom_call.1} parent=0 // loop_pre_header
    _
  $region3: #{tpu_custom_call.1} parent=0 // loop_header
    %s13 = sphi 0, %s17
    %p14 = scmp.ge.s32.totalorder %s13, 4
    %s23 = sphi 0, %s25
    %s26 = sphi 0, %s23
    %s27 = sphi 0, %s26
    %s43 = sphi 0, %s27
    %s47 = sphi 0, %s47
    %s49 = sphi 0, %s47
    %s50 = sphi 0, %s49
    %s64 = sphi 0, %s50
    %s68 = sphi 0, %s68
    %s70 = sphi 0, %s68
    %s71 = sphi 0, %s70
    %s85 = sphi 0, %s71
    %s89 = sphi 0, %s89
    %s91 = sphi 0, %s89
    %s92 = sphi 0, %s91
    %s106 = sphi 0, %s92
    %s110 = sphi 0, %s110
    %s112 = sphi 0, %s110
    %s113 = sphi 0, %s112
    %s127 = sphi 0, %s113
    %s131 = sphi 0, %s131
    %s133 = sphi 0, %s131
    %s134 = sphi 0, %s133
    %s148 = sphi 0, %s134
    %s152 = sphi 0, %s152
    %s154 = sphi 0, %s152
    %s155 = sphi 0, %s154
    %s169 = sphi 0, %s155
    %s175 = sphi 0, %s177
    %s178 = sphi 0, %s175
    %s179 = sphi 0, %s178
    %s195 = sphi 0, %s179
  $region4: #{tpu_custom_call.1} parent=0 // loop_header_branch
    %16 = sbr.rel (%p14) target = $region8
  $region5: #{tpu_custom_call.1} parent=0 // loop_body
    %s18 = ssub.s32 %s13, 1
    %s19 = ssub.s32 %s13, 2
    %s20 = sadd.s32 %s13, 1
    %s21 = ssub.s32 %s13, %s20
    %p22 = scmp.eq.s32.totalorder %s21, 0
    %s24 = sadd.s32 %s23, 1
    %s25 = scalar_select %p22, %s23, %s24
    %p28 = pneg %p22
    %p29 = scmp.eq.s32.totalorder %s13, 1
    %p30 = por %p28, %p29
    %p31 = scmp.ne.s32.totalorder %s23, %s26
    %p32 = scmp.eq.s32.totalorder %s13, 0
    %p33 = por %p31, %p32
    %p34 = scmp.ne.s32.totalorder %s23, %s26
    %p35 = scmp.eq.s32.totalorder %s18, 1
    %p36 = por %p34, %p35
    %p37 = scmp.ne.s32.totalorder %s26, %s27
    %p38 = scmp.eq.s32.totalorder %s18, 0
    %p39 = por %p37, %p38
    %p40 = scmp.ne.s32.totalorder %s26, %s27
    %p41 = scmp.eq.s32.totalorder %s19, 1
    %p42 = por %p40, %p41
    %p44 = scmp.ne.s32.totalorder %s27, %s43
    %p45 = scmp.eq.s32.totalorder %s19, 0
    %p46 = por %p44, %p45
    %s48 = sadd.s32 %s47, 1
    %p51 = scmp.eq.s32.totalorder %s13, 1
    %p52 = scmp.ne.s32.totalorder %s47, %s49
    %p53 = scmp.eq.s32.totalorder %s13, 0
    %p54 = por %p52, %p53
    %p55 = scmp.ne.s32.totalorder %s47, %s49
    %p56 = scmp.eq.s32.totalorder %s18, 1
    %p57 = por %p55, %p56
    %p58 = scmp.ne.s32.totalorder %s49, %s50
    %p59 = scmp.eq.s32.totalorder %s18, 0
    %p60 = por %p58, %p59
    %p61 = scmp.ne.s32.totalorder %s49, %s50
    %p62 = scmp.eq.s32.totalorder %s19, 1
    %p63 = por %p61, %p62
    %p65 = scmp.ne.s32.totalorder %s50, %s64
    %p66 = scmp.eq.s32.totalorder %s19, 0
    %p67 = por %p65, %p66
    %s69 = sadd.s32 %s68, 1
    %p72 = scmp.eq.s32.totalorder %s13, 1
    %p73 = scmp.ne.s32.totalorder %s68, %s70
    %p74 = scmp.eq.s32.totalorder %s13, 0
    %p75 = por %p73, %p74
    %p76 = scmp.ne.s32.totalorder %s68, %s70
    %p77 = scmp.eq.s32.totalorder %s18, 1
    %p78 = por %p76, %p77
    %p79 = scmp.ne.s32.totalorder %s70, %s71
    %p80 = scmp.eq.s32.totalorder %s18, 0
    %p81 = por %p79, %p80
    %p82 = scmp.ne.s32.totalorder %s70, %s71
    %p83 = scmp.eq.s32.totalorder %s19, 1
    %p84 = por %p82, %p83
    %p86 = scmp.ne.s32.totalorder %s71, %s85
    %p87 = scmp.eq.s32.totalorder %s19, 0
    %p88 = por %p86, %p87
    %s90 = sadd.s32 %s89, 1
    %p93 = scmp.eq.s32.totalorder %s13, 1
    %p94 = scmp.ne.s32.totalorder %s89, %s91
    %p95 = scmp.eq.s32.totalorder %s13, 0
    %p96 = por %p94, %p95
    %p97 = scmp.ne.s32.totalorder %s89, %s91
    %p98 = scmp.eq.s32.totalorder %s18, 1
    %p99 = por %p97, %p98
    %p100 = scmp.ne.s32.totalorder %s91, %s92
    %p101 = scmp.eq.s32.totalorder %s18, 0
    %p102 = por %p100, %p101
    %p103 = scmp.ne.s32.totalorder %s91, %s92
    %p104 = scmp.eq.s32.totalorder %s19, 1
    %p105 = por %p103, %p104
    %p107 = scmp.ne.s32.totalorder %s92, %s106
    %p108 = scmp.eq.s32.totalorder %s19, 0
    %p109 = por %p107, %p108
    %s111 = sadd.s32 %s110, 1
    %p114 = scmp.eq.s32.totalorder %s13, 1
    %p115 = scmp.ne.s32.totalorder %s110, %s112
    %p116 = scmp.eq.s32.totalorder %s13, 0
    %p117 = por %p115, %p116
    %p118 = scmp.ne.s32.totalorder %s110, %s112
    %p119 = scmp.eq.s32.totalorder %s18, 1
    %p120 = por %p118, %p119
    %p121 = scmp.ne.s32.totalorder %s112, %s113
    %p122 = scmp.eq.s32.totalorder %s18, 0
    %p123 = por %p121, %p122
    %p124 = scmp.ne.s32.totalorder %s112, %s113
    %p125 = scmp.eq.s32.totalorder %s19, 1
    %p126 = por %p124, %p125
    %p128 = scmp.ne.s32.totalorder %s113, %s127
    %p129 = scmp.eq.s32.totalorder %s19, 0
    %p130 = por %p128, %p129
    %s132 = sadd.s32 %s131, 1
    %p135 = scmp.eq.s32.totalorder %s13, 1
    %p136 = scmp.ne.s32.totalorder %s131, %s133
    %p137 = scmp.eq.s32.totalorder %s13, 0
    %p138 = por %p136, %p137
    %p139 = scmp.ne.s32.totalorder %s131, %s133
    %p140 = scmp.eq.s32.totalorder %s18, 1
    %p141 = por %p139, %p140
    %p142 = scmp.ne.s32.totalorder %s133, %s134
    %p143 = scmp.eq.s32.totalorder %s18, 0
    %p144 = por %p142, %p143
    %p145 = scmp.ne.s32.totalorder %s133, %s134
    %p146 = scmp.eq.s32.totalorder %s19, 1
    %p147 = por %p145, %p146
    %p149 = scmp.ne.s32.totalorder %s134, %s148
    %p150 = scmp.eq.s32.totalorder %s19, 0
    %p151 = por %p149, %p150
    %s153 = sadd.s32 %s152, 1
    %p156 = scmp.eq.s32.totalorder %s13, 1
    %p157 = scmp.ne.s32.totalorder %s152, %s154
    %p158 = scmp.eq.s32.totalorder %s13, 0
    %p159 = por %p157, %p158
    %p160 = scmp.ne.s32.totalorder %s152, %s154
    %p161 = scmp.eq.s32.totalorder %s18, 1
    %p162 = por %p160, %p161
    %p163 = scmp.ne.s32.totalorder %s154, %s155
    %p164 = scmp.eq.s32.totalorder %s18, 0
    %p165 = por %p163, %p164
    %p166 = scmp.ne.s32.totalorder %s154, %s155
    %p167 = scmp.eq.s32.totalorder %s19, 1
    %p168 = por %p166, %p167
    %p170 = scmp.ne.s32.totalorder %s155, %s169
    %p171 = scmp.eq.s32.totalorder %s19, 0
    %p172 = por %p170, %p171
    %s173 = ssub.s32 %s13, %s20
    %p174 = scmp.eq.s32.totalorder %s173, 0
    %s176 = sadd.s32 %s175, 1
    %s177 = scalar_select %p174, %s175, %s176
    %p180 = pneg %p174
    %p181 = scmp.eq.s32.totalorder %s13, 1
    %p182 = por %p180, %p181
    %p183 = scmp.ne.s32.totalorder %s175, %s178
    %p184 = scmp.eq.s32.totalorder %s13, 0
    %p185 = por %p183, %p184
    %p186 = scmp.ne.s32.totalorder %s175, %s178
    %p187 = scmp.eq.s32.totalorder %s18, 1
    %p188 = por %p186, %p187
    %p189 = scmp.ne.s32.totalorder %s178, %s179
    %p190 = scmp.eq.s32.totalorder %s18, 0
    %p191 = por %p189, %p190
    %p192 = scmp.ne.s32.totalorder %s178, %s179
    %p193 = scmp.eq.s32.totalorder %s19, 1
    %p194 = por %p192, %p193
    %p196 = scmp.ne.s32.totalorder %s179, %s195
    %p197 = scmp.eq.s32.totalorder %s19, 0
    %p198 = por %p196, %p197
    %p199 = scmp.le.s32.totalorder 1, %s13
    %p200 = scmp.lt.s32.totalorder %s13, 3
    %p201 = pnand %p199, %p200
    %p202 = pneg %p201
    // Predicated region
    $region9: #{tpu_custom_call.1} parent=5 // pred_check
      _
    $region10: #{tpu_custom_call.1} parent=5 // pred_check_branch
      %204 = sbr.rel (%p201) target = $region12
    $region11: #{tpu_custom_call.1} parent=5 // pred_region
      %s205 = ssub.s32 %s13, 1
      // Predicated region
      $region13: #{tpu_custom_call.1} parent=11 // pred_check
        %p206 = pneg %p60
      $region14: #{tpu_custom_call.1} parent=11 // pred_check_branch
        %208 = sbr.rel (%p206) target = $region16
      $region15: #{tpu_custom_call.1} parent=11 // pred_region
        _
      $region16: #{tpu_custom_call.1} parent=11 // pred_fallthru
        _
      // Predicated region
      $region17: #{tpu_custom_call.1} parent=11 // pred_check
        %p209 = pneg %p81
      $region18: #{tpu_custom_call.1} parent=11 // pred_check_branch
        %211 = sbr.rel (%p209) target = $region20
      $region19: #{tpu_custom_call.1} parent=11 // pred_region
        _
      $region20: #{tpu_custom_call.1} parent=11 // pred_fallthru
        _
      // Predicated region
      $region21: #{tpu_custom_call.1} parent=11 // pred_check
        %p212 = pneg %p102
      $region22: #{tpu_custom_call.1} parent=11 // pred_check_branch
        %214 = sbr.rel (%p212) target = $region24
      $region23: #{tpu_custom_call.1} parent=11 // pred_region
        _
      $region24: #{tpu_custom_call.1} parent=11 // pred_fallthru
        _
      // Predicated region
      $region25: #{tpu_custom_call.1} parent=11 // pred_check
        %p215 = pneg %p123
      $region26: #{tpu_custom_call.1} parent=11 // pred_check_branch
        %217 = sbr.rel (%p215) target = $region28
      $region27: #{tpu_custom_call.1} parent=11 // pred_region
        _
      $region28: #{tpu_custom_call.1} parent=11 // pred_fallthru
        _
      // Predicated region
      $region29: #{tpu_custom_call.1} parent=11 // pred_check
        %p218 = pneg %p144
      $region30: #{tpu_custom_call.1} parent=11 // pred_check_branch
        %220 = sbr.rel (%p218) target = $region32
      $region31: #{tpu_custom_call.1} parent=11 // pred_region
        _
      $region32: #{tpu_custom_call.1} parent=11 // pred_fallthru
        _
      // Predicated region
      $region33: #{tpu_custom_call.1} parent=11 // pred_check
        %p221 = pneg %p165
      $region34: #{tpu_custom_call.1} parent=11 // pred_check_branch
        %223 = sbr.rel (%p221) target = $region36
      $region35: #{tpu_custom_call.1} parent=11 // pred_region
        _
      $region36: #{tpu_custom_call.1} parent=11 // pred_fallthru
        _
    $region12: #{tpu_custom_call.1} parent=5 // pred_fallthru
      _
    %p224 = scmp.lt.s32.totalorder %s13, 2
    // Predicated region
    $region37: #{tpu_custom_call.1} parent=5 // pred_check
      %p225 = pneg %p224
    $region38: #{tpu_custom_call.1} parent=5 // pred_check_branch
      %227 = sbr.rel (%p225) target = $region40
    $region39: #{tpu_custom_call.1} parent=5 // pred_region
      // Predicated region
      $region41: #{tpu_custom_call.1} parent=39 // pred_check
        %p228 = pneg %p33
      $region42: #{tpu_custom_call.1} parent=39 // pred_check_branch
        %230 = sbr.rel (%p228) target = $region44
      $region43: #{tpu_custom_call.1} parent=39 // pred_region
        %s231 = smul.u32 16, %s13
        %p232 = scmp.lt.s32.totalorder %s231, 31
        %s233 = scalar_select %p232, %s231, 31
        %s234 = smul.addr %s233, 8
        %s235 = scalar_lea.vmem %s0, %s234
        %s236 = smul.u32 16, %s13
      $region44: #{tpu_custom_call.1} parent=39 // pred_fallthru
        _
    $region40: #{tpu_custom_call.1} parent=5 // pred_fallthru
      _
    %p237 = scmp.le.s32.totalorder 1, %s13
    %p238 = scmp.lt.s32.totalorder %s13, 3
    %p239 = pnand %p237, %p238
    %p240 = pneg %p239
    // Predicated region
    $region45: #{tpu_custom_call.1} parent=5 // pred_check
      _
    $region46: #{tpu_custom_call.1} parent=5 // pred_check_branch
      %242 = sbr.rel (%p239) target = $region48
    $region47: #{tpu_custom_call.1} parent=5 // pred_region
      %s243 = ssub.s32 %s13, 1
      %s244 = smul.u32 16, %s18
      %p245 = scmp.lt.s32.totalorder %s244, 31
      %s246 = scalar_select %p245, %s244, 31
      %s247 = smul.addr %s246, 8
      %s248 = scalar_lea.vmem %s0, %s247
      %p249 = pneg %p39
      %p250 = pneg %p36
      %p251 = pneg %p60
      %p252 = pneg %p57
      %p253 = pneg %p81
      %p254 = pneg %p78
      %p255 = pneg %p102
      %p256 = pneg %p99
      %p257 = pneg %p123
      %p258 = pneg %p120
      %p259 = pneg %p144
      %p260 = pneg %p141
      %p261 = pneg %p165
      %p262 = pneg %p162
      %p263 = pneg %p191
      %p264 = pneg %p188
      %s265 = smul.u32 16, %s18
      %p266 = scmp.lt.s32.totalorder %s265, 31
      %s267 = scalar_select %p266, %s265, 31
      %s268 = smul.addr %s267, 8
      %s269 = scalar_lea.vmem %s7, %s268
      %s270 = smul.u32 16, %s18
      %p271 = scmp.lt.s32.totalorder %s270, 31
      %s272 = scalar_select %p271, %s270, 31
      %s273 = smul.addr %s272, 8
      %s274 = scalar_lea.vmem %s0, %s273
      %s275 = smul.u32 16, %s18
      %s276 = smul.u32 16, %s18
      %p277 = scmp.lt.s32.totalorder %s276, 31
      %s278 = scalar_select %p277, %s276, 31
      %s279 = smul.addr %s278, 8
      %s280 = scalar_lea.vmem %s7, %s279
      %s281 = smul.u32 16, %s18
      %v282 = vld [vmem:[%s274] sm:$0xff]
      %v283 = vld [vmem:[%s274 + $0x8] sm:$0xff]
      %v284 = vld [vmem:[%s274 + $0x10] sm:$0xff]
      %v285 = vld [vmem:[%s274 + $0x18] sm:$0xff]
      %v286 = vld [vmem:[%s274 + $0x20] sm:$0xff]
      %v287 = vld [vmem:[%s274 + $0x28] sm:$0xff]
      %v288 = vld [vmem:[%s274 + $0x30] sm:$0xff]
      %v289 = vld [vmem:[%s274 + $0x38] sm:$0xff]
      %v290 = vld [vmem:[%s274 + $0x40] sm:$0xff]
      %v291 = vld [vmem:[%s274 + $0x48] sm:$0xff]
      %v292 = vld [vmem:[%s274 + $0x50] sm:$0xff]
      %v293 = vld [vmem:[%s274 + $0x58] sm:$0xff]
      %v294 = vld [vmem:[%s274 + $0x60] sm:$0xff]
      %v295 = vld [vmem:[%s274 + $0x68] sm:$0xff]
      %v296 = vld [vmem:[%s274 + $0x70] sm:$0xff]
      %v297 = vld [vmem:[%s274 + $0x78] sm:$0xff]
      %v298 = vld [vmem:[%s1] sm:$0xff]
      %v299 = vld [vmem:[%s1 + $0x8] sm:$0xff]
      %v300 = vld [vmem:[%s2] sm:$0x1]
      %v302 = vlaneseq
      %v303 = vshrl.u32 %v302, 7
      %v304 = vsub.s32 0, %v303
      %v305 = vrot.slane %v300, %v304
      %vm307 = vcmask 130048
      %v309 = vsel %vm307, %v282, 0
      %v312 = vsel %vm307, %v283, 0
      %v315 = vsel %vm307, %v284, 0
      %v318 = vsel %vm307, %v285, 0
      %v321 = vsel %vm307, %v286, 0
      %v324 = vsel %vm307, %v287, 0
      %v327 = vsel %vm307, %v288, 0
      %v330 = vsel %vm307, %v289, 0
      %v333 = vsel %vm307, %v290, 0
      %v336 = vsel %vm307, %v291, 0
      %v339 = vsel %vm307, %v292, 0
      %v342 = vsel %vm307, %v293, 0
      %v345 = vsel %vm307, %v294, 0
      %v348 = vsel %vm307, %v295, 0
      %v351 = vsel %vm307, %v296, 0
      %v354 = vsel %vm307, %v297, 0
      %356 = vmatprep.subr.mxu0 0.0
      %357 = vmatpush1.msra.mxu0 0.0
      %358 = vmatprep.subr.mxu0 0.0
      %359 = vmatpush1.msra.mxu0 0.0
      %360 = vmatprep.subr.mxu0 0.0
      %361 = vmatpush1.msra.mxu0 0.0
      %362 = vmatprep.subr.mxu0 0.0
      %363 = vmatpush1.msra.mxu0 0.0
      %364 = vmatprep.subr.mxu0 0.0
      %365 = vmatpush1.msra.mxu0 0.0
      %366 = vmatprep.subr.mxu0 0.0
      %367 = vmatpush1.msra.mxu0 0.0
      %368 = vmatprep.subr.mxu0 0.0
      %369 = vmatpush1.msra.mxu0 0.0
      %370 = vmatprep.subr.mxu0 0.0
      %371 = vmatpush1.msra.mxu0 0.0
      %372 = vmatprep.subr.mxu0 0.0
      %373 = vmatpush1.msra.mxu0 0.0
      %374 = vmatprep.subr.mxu0 0.0
      %375 = vmatpush1.msra.mxu0 0.0
      %376 = vmatprep.subr.mxu0 0.0
      %377 = vmatpush1.msra.mxu0 0.0
      %378 = vmatprep.subr.mxu0 0.0
      %379 = vmatpush1.msra.mxu0 0.0
      %380 = vmatprep.subr.mxu0 0.0
      %381 = vmatpush1.msra.mxu0 0.0
      %382 = vmatprep.subr.mxu0 0.0
      %383 = vmatpush1.msra.mxu0 0.0
      %384 = vmatprep.subr.mxu0 0.0
      %385 = vmatpush1.msra.mxu0 %v299
      %386 = vmatprep.subr.mxu0 0.0
      %387 = vmatpush1.msra.mxu0 %v298
      %388 = vmatprep.subr.mxu0 0.0
      %389 = vmatpush2.msra.mxu0 0.0
      %390 = vmatprep.subr.mxu0 0.0
      %391 = vmatpush2.msra.mxu0 0.0
      %392 = vmatprep.subr.mxu0 0.0
      %393 = vmatpush2.msra.mxu0 0.0
      %394 = vmatprep.subr.mxu0 0.0
      %395 = vmatpush2.msra.mxu0 0.0
      %396 = vmatprep.subr.mxu0 0.0
      %397 = vmatpush2.msra.mxu0 0.0
      %398 = vmatprep.subr.mxu0 0.0
      %399 = vmatpush2.msra.mxu0 0.0
      %400 = vmatprep.subr.mxu0 0.0
      %401 = vmatpush2.msra.mxu0 0.0
      %402 = vmatprep.subr.mxu0 0.0
      %403 = vmatpush2.msra.mxu0 0.0
      %404 = vmatprep.subr.mxu0 0.0
      %405 = vmatpush2.msra.mxu0 0.0
      %406 = vmatprep.subr.mxu0 0.0
      %407 = vmatpush2.msra.mxu0 0.0
      %408 = vmatprep.subr.mxu0 0.0
      %409 = vmatpush2.msra.mxu0 0.0
      %410 = vmatprep.subr.mxu0 0.0
      %411 = vmatpush2.msra.mxu0 0.0
      %412 = vmatprep.subr.mxu0 0.0
      %413 = vmatpush2.msra.mxu0 0.0
      %414 = vmatprep.subr.mxu0 0.0
      %415 = vmatpush2.msra.mxu0 0.0
      %416 = vmatprep.subr.mxu0 0.0
      %417 = vmatpush2.msra.mxu0 0.0
      %418 = vmatprep.subr.mxu0 0.0
      %419 = vmatpush2.msra.mxu0 0.0
      %420 = vmatprep.mubr.f32.mxu0 0.0
      %421 = vmatmul.mubr.f32.gmra.mxu0 %v309
      %v422 = vpop.f32.mrf.mxu0
      %v423 = vadd.f32 %v305, %v422
      %v424 = vpop.f32.mrf.mxu0
      %425 = vmatprep.mubr.f32.mxu0 0.0
      %426 = vmatmul.mubr.f32.gmra.mxu0 %v312
      %v427 = vpop.f32.mrf.mxu0
      %v428 = vadd.f32 %v305, %v427
      %v429 = vpop.f32.mrf.mxu0
      %430 = vmatprep.mubr.f32.mxu0 0.0
      %431 = vmatmul.mubr.f32.gmra.mxu0 %v315
      %v432 = vpop.f32.mrf.mxu0
      %v433 = vadd.f32 %v305, %v432
      %v434 = vpop.f32.mrf.mxu0
      %435 = vmatprep.mubr.f32.mxu0 0.0
      %436 = vmatmul.mubr.f32.gmra.mxu0 %v318
      %v437 = vpop.f32.mrf.mxu0
      %v438 = vadd.f32 %v305, %v437
      %v439 = vpop.f32.mrf.mxu0
      %440 = vmatprep.mubr.f32.mxu0 0.0
      %441 = vmatmul.mubr.f32.gmra.mxu0 %v321
      %v442 = vpop.f32.mrf.mxu0
      %v443 = vadd.f32 %v305, %v442
      %v444 = vpop.f32.mrf.mxu0
      %445 = vmatprep.mubr.f32.mxu0 0.0
      %446 = vmatmul.mubr.f32.gmra.mxu0 %v324
      %v447 = vpop.f32.mrf.mxu0
      %v448 = vadd.f32 %v305, %v447
      %v449 = vpop.f32.mrf.mxu0
      %450 = vmatprep.mubr.f32.mxu0 0.0
      %451 = vmatmul.mubr.f32.gmra.mxu0 %v327
      %v452 = vpop.f32.mrf.mxu0
      %v453 = vadd.f32 %v305, %v452
      %v454 = vpop.f32.mrf.mxu0
      %455 = vmatprep.mubr.f32.mxu0 0.0
      %456 = vmatmul.mubr.f32.gmra.mxu0 %v330
      %v457 = vpop.f32.mrf.mxu0
      %v458 = vadd.f32 %v305, %v457
      %v459 = vpop.f32.mrf.mxu0
      %460 = vmatprep.mubr.f32.mxu0 0.0
      %461 = vmatmul.mubr.f32.gmra.mxu0 %v333
      %v462 = vpop.f32.mrf.mxu0
      %v463 = vadd.f32 %v305, %v462
      %v464 = vpop.f32.mrf.mxu0
      %465 = vmatprep.mubr.f32.mxu0 0.0
      %466 = vmatmul.mubr.f32.gmra.mxu0 %v336
      %v467 = vpop.f32.mrf.mxu0
      %v468 = vadd.f32 %v305, %v467
      %v469 = vpop.f32.mrf.mxu0
      %470 = vmatprep.mubr.f32.mxu0 0.0
      %471 = vmatmul.mubr.f32.gmra.mxu0 %v339
      %v472 = vpop.f32.mrf.mxu0
      %v473 = vadd.f32 %v305, %v472
      %v474 = vpop.f32.mrf.mxu0
      %475 = vmatprep.mubr.f32.mxu0 0.0
      %476 = vmatmul.mubr.f32.gmra.mxu0 %v342
      %v477 = vpop.f32.mrf.mxu0
      %v478 = vadd.f32 %v305, %v477
      %v479 = vpop.f32.mrf.mxu0
      %480 = vmatprep.mubr.f32.mxu0 0.0
      %481 = vmatmul.mubr.f32.gmra.mxu0 %v345
      %v482 = vpop.f32.mrf.mxu0
      %v483 = vadd.f32 %v305, %v482
      %v484 = vpop.f32.mrf.mxu0
      %485 = vmatprep.mubr.f32.mxu0 0.0
      %486 = vmatmul.mubr.f32.gmra.mxu0 %v348
      %v487 = vpop.f32.mrf.mxu0
      %v488 = vadd.f32 %v305, %v487
      %v489 = vpop.f32.mrf.mxu0
      %490 = vmatprep.mubr.f32.mxu0 0.0
      %491 = vmatmul.mubr.f32.gmra.mxu0 %v351
      %v492 = vpop.f32.mrf.mxu0
      %v493 = vadd.f32 %v305, %v492
      %v494 = vpop.f32.mrf.mxu0
      %495 = vmatprep.mubr.f32.mxu0 0.0
      %496 = vmatmul.mubr.f32.gmra.mxu0 %v354
      %v497 = vpop.f32.mrf.mxu0
      %v498 = vadd.f32 %v305, %v497
      %v499 = vpop.f32.mrf.mxu0
      %500 = vdwg.mxu0
      %v501 = vmax.f32 %v423, 0.0
      %v502 = vmax.f32 %v428, 0.0
      %v503 = vmax.f32 %v433, 0.0
      %v504 = vmax.f32 %v438, 0.0
      %v505 = vmax.f32 %v443, 0.0
      %v506 = vmax.f32 %v448, 0.0
      %v507 = vmax.f32 %v453, 0.0
      %v508 = vmax.f32 %v458, 0.0
      %v509 = vmax.f32 %v463, 0.0
      %v510 = vmax.f32 %v468, 0.0
      %v511 = vmax.f32 %v473, 0.0
      %v512 = vmax.f32 %v478, 0.0
      %v513 = vmax.f32 %v483, 0.0
      %v514 = vmax.f32 %v488, 0.0
      %v515 = vmax.f32 %v493, 0.0
      %v516 = vmax.f32 %v498, 0.0
      %v517 = vld [vmem:[%s3] sm:$0xff]
      %v518 = vld [vmem:[%s3 + $0x8] sm:$0xff]
      %v519 = vld [vmem:[%s3 + $0x10] sm:$0xff]
      %v520 = vld [vmem:[%s3 + $0x18] sm:$0xff]
      %v521 = vld [vmem:[%s4] sm:$0x1]
      %v523 = vlaneseq
      %v524 = vshrl.u32 %v523, 7
      %v525 = vsub.s32 0, %v524
      %v526 = vrot.slane %v521, %v525
      %vm528 = vcmask 261120
      %v530 = vsel %vm528, %v501, 0
      %v533 = vsel %vm528, %v502, 0
      %v536 = vsel %vm528, %v503, 0
      %v539 = vsel %vm528, %v504, 0
      %v542 = vsel %vm528, %v505, 0
      %v545 = vsel %vm528, %v506, 0
      %v548 = vsel %vm528, %v507, 0
      %v551 = vsel %vm528, %v508, 0
      %v554 = vsel %vm528, %v509, 0
      %v557 = vsel %vm528, %v510, 0
      %v560 = vsel %vm528, %v511, 0
      %v563 = vsel %vm528, %v512, 0
      %v566 = vsel %vm528, %v513, 0
      %v569 = vsel %vm528, %v514, 0
      %v572 = vsel %vm528, %v515, 0
      %v575 = vsel %vm528, %v516, 0
      %577 = vmatprep.subr.mxu0 0.0
      %578 = vmatpush1.msra.mxu0 0.0
      %579 = vmatprep.subr.mxu0 0.0
      %580 = vmatpush1.msra.mxu0 0.0
      %581 = vmatprep.subr.mxu0 0.0
      %582 = vmatpush1.msra.mxu0 0.0
      %583 = vmatprep.subr.mxu0 0.0
      %584 = vmatpush1.msra.mxu0 0.0
      %585 = vmatprep.subr.mxu0 0.0
      %586 = vmatpush1.msra.mxu0 0.0
      %587 = vmatprep.subr.mxu0 0.0
      %588 = vmatpush1.msra.mxu0 0.0
      %589 = vmatprep.subr.mxu0 0.0
      %590 = vmatpush1.msra.mxu0 0.0
      %591 = vmatprep.subr.mxu0 0.0
      %592 = vmatpush1.msra.mxu0 0.0
      %593 = vmatprep.subr.mxu0 0.0
      %594 = vmatpush1.msra.mxu0 0.0
      %595 = vmatprep.subr.mxu0 0.0
      %596 = vmatpush1.msra.mxu0 0.0
      %597 = vmatprep.subr.mxu0 0.0
      %598 = vmatpush1.msra.mxu0 0.0
      %599 = vmatprep.subr.mxu0 0.0
      %600 = vmatpush1.msra.mxu0 0.0
      %601 = vmatprep.subr.mxu0 0.0
      %602 = vmatpush1.msra.mxu0 %v520
      %603 = vmatprep.subr.mxu0 0.0
      %604 = vmatpush1.msra.mxu0 %v519
      %605 = vmatprep.subr.mxu0 0.0
      %606 = vmatpush1.msra.mxu0 %v518
      %607 = vmatprep.subr.mxu0 0.0
      %608 = vmatpush1.msra.mxu0 %v517
      %609 = vmatprep.subr.mxu0 0.0
      %610 = vmatpush2.msra.mxu0 0.0
      %611 = vmatprep.subr.mxu0 0.0
      %612 = vmatpush2.msra.mxu0 0.0
      %613 = vmatprep.subr.mxu0 0.0
      %614 = vmatpush2.msra.mxu0 0.0
      %615 = vmatprep.subr.mxu0 0.0
      %616 = vmatpush2.msra.mxu0 0.0
      %617 = vmatprep.subr.mxu0 0.0
      %618 = vmatpush2.msra.mxu0 0.0
      %619 = vmatprep.subr.mxu0 0.0
      %620 = vmatpush2.msra.mxu0 0.0
      %621 = vmatprep.subr.mxu0 0.0
      %622 = vmatpush2.msra.mxu0 0.0
      %623 = vmatprep.subr.mxu0 0.0
      %624 = vmatpush2.msra.mxu0 0.0
      %625 = vmatprep.subr.mxu0 0.0
      %626 = vmatpush2.msra.mxu0 0.0
      %627 = vmatprep.subr.mxu0 0.0
      %628 = vmatpush2.msra.mxu0 0.0
      %629 = vmatprep.subr.mxu0 0.0
      %630 = vmatpush2.msra.mxu0 0.0
      %631 = vmatprep.subr.mxu0 0.0
      %632 = vmatpush2.msra.mxu0 0.0
      %633 = vmatprep.subr.mxu0 0.0
      %634 = vmatpush2.msra.mxu0 0.0
      %635 = vmatprep.subr.mxu0 0.0
      %636 = vmatpush2.msra.mxu0 0.0
      %637 = vmatprep.subr.mxu0 0.0
      %638 = vmatpush2.msra.mxu0 0.0
      %639 = vmatprep.subr.mxu0 0.0
      %640 = vmatpush2.msra.mxu0 0.0
      %641 = vmatprep.mubr.f32.mxu0 0.0
      %642 = vmatmul.mubr.f32.gmra.mxu0 %v530
      %v643 = vpop.f32.mrf.mxu0
      %v644 = vadd.f32 %v526, %v643
      %v645 = vpop.f32.mrf.mxu0
      %646 = vmatprep.mubr.f32.mxu0 0.0
      %647 = vmatmul.mubr.f32.gmra.mxu0 %v533
      %v648 = vpop.f32.mrf.mxu0
      %v649 = vadd.f32 %v526, %v648
      %v650 = vpop.f32.mrf.mxu0
      %651 = vmatprep.mubr.f32.mxu0 0.0
      %652 = vmatmul.mubr.f32.gmra.mxu0 %v536
      %v653 = vpop.f32.mrf.mxu0
      %v654 = vadd.f32 %v526, %v653
      %v655 = vpop.f32.mrf.mxu0
      %656 = vmatprep.mubr.f32.mxu0 0.0
      %657 = vmatmul.mubr.f32.gmra.mxu0 %v539
      %v658 = vpop.f32.mrf.mxu0
      %v659 = vadd.f32 %v526, %v658
      %v660 = vpop.f32.mrf.mxu0
      %661 = vmatprep.mubr.f32.mxu0 0.0
      %662 = vmatmul.mubr.f32.gmra.mxu0 %v542
      %v663 = vpop.f32.mrf.mxu0
      %v664 = vadd.f32 %v526, %v663
      %v665 = vpop.f32.mrf.mxu0
      %666 = vmatprep.mubr.f32.mxu0 0.0
      %667 = vmatmul.mubr.f32.gmra.mxu0 %v545
      %v668 = vpop.f32.mrf.mxu0
      %v669 = vadd.f32 %v526, %v668
      %v670 = vpop.f32.mrf.mxu0
      %671 = vmatprep.mubr.f32.mxu0 0.0
      %672 = vmatmul.mubr.f32.gmra.mxu0 %v548
      %v673 = vpop.f32.mrf.mxu0
      %v674 = vadd.f32 %v526, %v673
      %v675 = vpop.f32.mrf.mxu0
      %676 = vmatprep.mubr.f32.mxu0 0.0
      %677 = vmatmul.mubr.f32.gmra.mxu0 %v551
      %v678 = vpop.f32.mrf.mxu0
      %v679 = vadd.f32 %v526, %v678
      %v680 = vpop.f32.mrf.mxu0
      %681 = vmatprep.mubr.f32.mxu0 0.0
      %682 = vmatmul.mubr.f32.gmra.mxu0 %v554
      %v683 = vpop.f32.mrf.mxu0
      %v684 = vadd.f32 %v526, %v683
      %v685 = vpop.f32.mrf.mxu0
      %686 = vmatprep.mubr.f32.mxu0 0.0
      %687 = vmatmul.mubr.f32.gmra.mxu0 %v557
      %v688 = vpop.f32.mrf.mxu0
      %v689 = vadd.f32 %v526, %v688
      %v690 = vpop.f32.mrf.mxu0
      %691 = vmatprep.mubr.f32.mxu0 0.0
      %692 = vmatmul.mubr.f32.gmra.mxu0 %v560
      %v693 = vpop.f32.mrf.mxu0
      %v694 = vadd.f32 %v526, %v693
      %v695 = vpop.f32.mrf.mxu0
      %696 = vmatprep.mubr.f32.mxu0 0.0
      %697 = vmatmul.mubr.f32.gmra.mxu0 %v563
      %v698 = vpop.f32.mrf.mxu0
      %v699 = vadd.f32 %v526, %v698
      %v700 = vpop.f32.mrf.mxu0
      %701 = vmatprep.mubr.f32.mxu0 0.0
      %702 = vmatmul.mubr.f32.gmra.mxu0 %v566
      %v703 = vpop.f32.mrf.mxu0
      %v704 = vadd.f32 %v526, %v703
      %v705 = vpop.f32.mrf.mxu0
      %706 = vmatprep.mubr.f32.mxu0 0.0
      %707 = vmatmul.mubr.f32.gmra.mxu0 %v569
      %v708 = vpop.f32.mrf.mxu0
      %v709 = vadd.f32 %v526, %v708
      %v710 = vpop.f32.mrf.mxu0
      %711 = vmatprep.mubr.f32.mxu0 0.0
      %712 = vmatmul.mubr.f32.gmra.mxu0 %v572
      %v713 = vpop.f32.mrf.mxu0
      %v714 = vadd.f32 %v526, %v713
      %v715 = vpop.f32.mrf.mxu0
      %716 = vmatprep.mubr.f32.mxu0 0.0
      %717 = vmatmul.mubr.f32.gmra.mxu0 %v575
      %v718 = vpop.f32.mrf.mxu0
      %v719 = vadd.f32 %v526, %v718
      %v720 = vpop.f32.mrf.mxu0
      %721 = vdwg.mxu0
      %v722 = vmax.f32 %v644, 0.0
      %v723 = vmax.f32 %v649, 0.0
      %v724 = vmax.f32 %v654, 0.0
      %v725 = vmax.f32 %v659, 0.0
      %v726 = vmax.f32 %v664, 0.0
      %v727 = vmax.f32 %v669, 0.0
      %v728 = vmax.f32 %v674, 0.0
      %v729 = vmax.f32 %v679, 0.0
      %v730 = vmax.f32 %v684, 0.0
      %v731 = vmax.f32 %v689, 0.0
      %v732 = vmax.f32 %v694, 0.0
      %v733 = vmax.f32 %v699, 0.0
      %v734 = vmax.f32 %v704, 0.0
      %v735 = vmax.f32 %v709, 0.0
      %v736 = vmax.f32 %v714, 0.0
      %v737 = vmax.f32 %v719, 0.0
      %s738 = scalar_lea.vmem %s3, 32
      %v739 = vld [vmem:[%s738] sm:$0xff]
      %v740 = vld [vmem:[%s738 + $0x8] sm:$0xff]
      %v741 = vld [vmem:[%s738 + $0x10] sm:$0xff]
      %v742 = vld [vmem:[%s738 + $0x18] sm:$0xff]
      %s743 = scalar_lea.vmem %s4, 1
      %v744 = vld [vmem:[%s743] sm:$0x1]
      %v746 = vlaneseq
      %v747 = vshrl.u32 %v746, 7
      %v748 = vsub.s32 0, %v747
      %v749 = vrot.slane %v744, %v748
      %v752 = vsel %vm528, %v722, 0
      %v755 = vsel %vm528, %v723, 0
      %v758 = vsel %vm528, %v724, 0
      %v761 = vsel %vm528, %v725, 0
      %v764 = vsel %vm528, %v726, 0
      %v767 = vsel %vm528, %v727, 0
      %v770 = vsel %vm528, %v728, 0
      %v773 = vsel %vm528, %v729, 0
      %v776 = vsel %vm528, %v730, 0
      %v779 = vsel %vm528, %v731, 0
      %v782 = vsel %vm528, %v732, 0
      %v785 = vsel %vm528, %v733, 0
      %v788 = vsel %vm528, %v734, 0
      %v791 = vsel %vm528, %v735, 0
      %v794 = vsel %vm528, %v736, 0
      %v797 = vsel %vm528, %v737, 0
      %799 = vmatprep.subr.mxu0 0.0
      %800 = vmatpush1.msra.mxu0 0.0
      %801 = vmatprep.subr.mxu0 0.0
      %802 = vmatpush1.msra.mxu0 0.0
      %803 = vmatprep.subr.mxu0 0.0
      %804 = vmatpush1.msra.mxu0 0.0
      %805 = vmatprep.subr.mxu0 0.0
      %806 = vmatpush1.msra.mxu0 0.0
      %807 = vmatprep.subr.mxu0 0.0
      %808 = vmatpush1.msra.mxu0 0.0
      %809 = vmatprep.subr.mxu0 0.0
      %810 = vmatpush1.msra.mxu0 0.0
      %811 = vmatprep.subr.mxu0 0.0
      %812 = vmatpush1.msra.mxu0 0.0
      %813 = vmatprep.subr.mxu0 0.0
      %814 = vmatpush1.msra.mxu0 0.0
      %815 = vmatprep.subr.mxu0 0.0
      %816 = vmatpush1.msra.mxu0 0.0
      %817 = vmatprep.subr.mxu0 0.0
      %818 = vmatpush1.msra.mxu0 0.0
      %819 = vmatprep.subr.mxu0 0.0
      %820 = vmatpush1.msra.mxu0 0.0
      %821 = vmatprep.subr.mxu0 0.0
      %822 = vmatpush1.msra.mxu0 0.0
      %823 = vmatprep.subr.mxu0 0.0
      %824 = vmatpush1.msra.mxu0 %v742
      %825 = vmatprep.subr.mxu0 0.0
      %826 = vmatpush1.msra.mxu0 %v741
      %827 = vmatprep.subr.mxu0 0.0
      %828 = vmatpush1.msra.mxu0 %v740
      %829 = vmatprep.subr.mxu0 0.0
      %830 = vmatpush1.msra.mxu0 %v739
      %831 = vmatprep.subr.mxu0 0.0
      %832 = vmatpush2.msra.mxu0 0.0
      %833 = vmatprep.subr.mxu0 0.0
      %834 = vmatpush2.msra.mxu0 0.0
      %835 = vmatprep.subr.mxu0 0.0
      %836 = vmatpush2.msra.mxu0 0.0
      %837 = vmatprep.subr.mxu0 0.0
      %838 = vmatpush2.msra.mxu0 0.0
      %839 = vmatprep.subr.mxu0 0.0
      %840 = vmatpush2.msra.mxu0 0.0
      %841 = vmatprep.subr.mxu0 0.0
      %842 = vmatpush2.msra.mxu0 0.0
      %843 = vmatprep.subr.mxu0 0.0
      %844 = vmatpush2.msra.mxu0 0.0
      %845 = vmatprep.subr.mxu0 0.0
      %846 = vmatpush2.msra.mxu0 0.0
      %847 = vmatprep.subr.mxu0 0.0
      %848 = vmatpush2.msra.mxu0 0.0
      %849 = vmatprep.subr.mxu0 0.0
      %850 = vmatpush2.msra.mxu0 0.0
      %851 = vmatprep.subr.mxu0 0.0
      %852 = vmatpush2.msra.mxu0 0.0
      %853 = vmatprep.subr.mxu0 0.0
      %854 = vmatpush2.msra.mxu0 0.0
      %855 = vmatprep.subr.mxu0 0.0
      %856 = vmatpush2.msra.mxu0 0.0
      %857 = vmatprep.subr.mxu0 0.0
      %858 = vmatpush2.msra.mxu0 0.0
      %859 = vmatprep.subr.mxu0 0.0
      %860 = vmatpush2.msra.mxu0 0.0
      %861 = vmatprep.subr.mxu0 0.0
      %862 = vmatpush2.msra.mxu0 0.0
      %863 = vmatprep.mubr.f32.mxu0 0.0
      %864 = vmatmul.mubr.f32.gmra.mxu0 %v752
      %v865 = vpop.f32.mrf.mxu0
      %v866 = vadd.f32 %v749, %v865
      %v867 = vpop.f32.mrf.mxu0
      %868 = vmatprep.mubr.f32.mxu0 0.0
      %869 = vmatmul.mubr.f32.gmra.mxu0 %v755
      %v870 = vpop.f32.mrf.mxu0
      %v871 = vadd.f32 %v749, %v870
      %v872 = vpop.f32.mrf.mxu0
      %873 = vmatprep.mubr.f32.mxu0 0.0
      %874 = vmatmul.mubr.f32.gmra.mxu0 %v758
      %v875 = vpop.f32.mrf.mxu0
      %v876 = vadd.f32 %v749, %v875
      %v877 = vpop.f32.mrf.mxu0
      %878 = vmatprep.mubr.f32.mxu0 0.0
      %879 = vmatmul.mubr.f32.gmra.mxu0 %v761
      %v880 = vpop.f32.mrf.mxu0
      %v881 = vadd.f32 %v749, %v880
      %v882 = vpop.f32.mrf.mxu0
      %883 = vmatprep.mubr.f32.mxu0 0.0
      %884 = vmatmul.mubr.f32.gmra.mxu0 %v764
      %v885 = vpop.f32.mrf.mxu0
      %v886 = vadd.f32 %v749, %v885
      %v887 = vpop.f32.mrf.mxu0
      %888 = vmatprep.mubr.f32.mxu0 0.0
      %889 = vmatmul.mubr.f32.gmra.mxu0 %v767
      %v890 = vpop.f32.mrf.mxu0
      %v891 = vadd.f32 %v749, %v890
      %v892 = vpop.f32.mrf.mxu0
      %893 = vmatprep.mubr.f32.mxu0 0.0
      %894 = vmatmul.mubr.f32.gmra.mxu0 %v770
      %v895 = vpop.f32.mrf.mxu0
      %v896 = vadd.f32 %v749, %v895
      %v897 = vpop.f32.mrf.mxu0
      %898 = vmatprep.mubr.f32.mxu0 0.0
      %899 = vmatmul.mubr.f32.gmra.mxu0 %v773
      %v900 = vpop.f32.mrf.mxu0
      %v901 = vadd.f32 %v749, %v900
      %v902 = vpop.f32.mrf.mxu0
      %903 = vmatprep.mubr.f32.mxu0 0.0
      %904 = vmatmul.mubr.f32.gmra.mxu0 %v776
      %v905 = vpop.f32.mrf.mxu0
      %v906 = vadd.f32 %v749, %v905
      %v907 = vpop.f32.mrf.mxu0
      %908 = vmatprep.mubr.f32.mxu0 0.0
      %909 = vmatmul.mubr.f32.gmra.mxu0 %v779
      %v910 = vpop.f32.mrf.mxu0
      %v911 = vadd.f32 %v749, %v910
      %v912 = vpop.f32.mrf.mxu0
      %913 = vmatprep.mubr.f32.mxu0 0.0
      %914 = vmatmul.mubr.f32.gmra.mxu0 %v782
      %v915 = vpop.f32.mrf.mxu0
      %v916 = vadd.f32 %v749, %v915
      %v917 = vpop.f32.mrf.mxu0
      %918 = vmatprep.mubr.f32.mxu0 0.0
      %919 = vmatmul.mubr.f32.gmra.mxu0 %v785
      %v920 = vpop.f32.mrf.mxu0
      %v921 = vadd.f32 %v749, %v920
      %v922 = vpop.f32.mrf.mxu0
      %923 = vmatprep.mubr.f32.mxu0 0.0
      %924 = vmatmul.mubr.f32.gmra.mxu0 %v788
      %v925 = vpop.f32.mrf.mxu0
      %v926 = vadd.f32 %v749, %v925
      %v927 = vpop.f32.mrf.mxu0
      %928 = vmatprep.mubr.f32.mxu0 0.0
      %929 = vmatmul.mubr.f32.gmra.mxu0 %v791
      %v930 = vpop.f32.mrf.mxu0
      %v931 = vadd.f32 %v749, %v930
      %v932 = vpop.f32.mrf.mxu0
      %933 = vmatprep.mubr.f32.mxu0 0.0
      %934 = vmatmul.mubr.f32.gmra.mxu0 %v794
      %v935 = vpop.f32.mrf.mxu0
      %v936 = vadd.f32 %v749, %v935
      %v937 = vpop.f32.mrf.mxu0
      %938 = vmatprep.mubr.f32.mxu0 0.0
      %939 = vmatmul.mubr.f32.gmra.mxu0 %v797
      %v940 = vpop.f32.mrf.mxu0
      %v941 = vadd.f32 %v749, %v940
      %v942 = vpop.f32.mrf.mxu0
      %943 = vdwg.mxu0
      %v944 = vmax.f32 %v866, 0.0
      %v945 = vmax.f32 %v871, 0.0
      %v946 = vmax.f32 %v876, 0.0
      %v947 = vmax.f32 %v881, 0.0
      %v948 = vmax.f32 %v886, 0.0
      %v949 = vmax.f32 %v891, 0.0
      %v950 = vmax.f32 %v896, 0.0
      %v951 = vmax.f32 %v901, 0.0
      %v952 = vmax.f32 %v906, 0.0
      %v953 = vmax.f32 %v911, 0.0
      %v954 = vmax.f32 %v916, 0.0
      %v955 = vmax.f32 %v921, 0.0
      %v956 = vmax.f32 %v926, 0.0
      %v957 = vmax.f32 %v931, 0.0
      %v958 = vmax.f32 %v936, 0.0
      %v959 = vmax.f32 %v941, 0.0
      %s960 = scalar_lea.vmem %s3, 64
      %v961 = vld [vmem:[%s960] sm:$0xff]
      %v962 = vld [vmem:[%s960 + $0x8] sm:$0xff]
      %v963 = vld [vmem:[%s960 + $0x10] sm:$0xff]
      %v964 = vld [vmem:[%s960 + $0x18] sm:$0xff]
      %s965 = scalar_lea.vmem %s4, 2
      %v966 = vld [vmem:[%s965] sm:$0x1]
      %v968 = vlaneseq
      %v969 = vshrl.u32 %v968, 7
      %v970 = vsub.s32 0, %v969
      %v971 = vrot.slane %v966, %v970
      %v974 = vsel %vm528, %v944, 0
      %v977 = vsel %vm528, %v945, 0
      %v980 = vsel %vm528, %v946, 0
      %v983 = vsel %vm528, %v947, 0
      %v986 = vsel %vm528, %v948, 0
      %v989 = vsel %vm528, %v949, 0
      %v992 = vsel %vm528, %v950, 0
      %v995 = vsel %vm528, %v951, 0
      %v998 = vsel %vm528, %v952, 0
      %v1001 = vsel %vm528, %v953, 0
      %v1004 = vsel %vm528, %v954, 0
      %v1007 = vsel %vm528, %v955, 0
      %v1010 = vsel %vm528, %v956, 0
      %v1013 = vsel %vm528, %v957, 0
      %v1016 = vsel %vm528, %v958, 0
      %v1019 = vsel %vm528, %v959, 0
      %1021 = vmatprep.subr.mxu0 0.0
      %1022 = vmatpush1.msra.mxu0 0.0
      %1023 = vmatprep.subr.mxu0 0.0
      %1024 = vmatpush1.msra.mxu0 0.0
      %1025 = vmatprep.subr.mxu0 0.0
      %1026 = vmatpush1.msra.mxu0 0.0
      %1027 = vmatprep.subr.mxu0 0.0
      %1028 = vmatpush1.msra.mxu0 0.0
      %1029 = vmatprep.subr.mxu0 0.0
      %1030 = vmatpush1.msra.mxu0 0.0
      %1031 = vmatprep.subr.mxu0 0.0
      %1032 = vmatpush1.msra.mxu0 0.0
      %1033 = vmatprep.subr.mxu0 0.0
      %1034 = vmatpush1.msra.mxu0 0.0
      %1035 = vmatprep.subr.mxu0 0.0
      %1036 = vmatpush1.msra.mxu0 0.0
      %1037 = vmatprep.subr.mxu0 0.0
      %1038 = vmatpush1.msra.mxu0 0.0
      %1039 = vmatprep.subr.mxu0 0.0
      %1040 = vmatpush1.msra.mxu0 0.0
      %1041 = vmatprep.subr.mxu0 0.0
      %1042 = vmatpush1.msra.mxu0 0.0
      %1043 = vmatprep.subr.mxu0 0.0
      %1044 = vmatpush1.msra.mxu0 0.0
      %1045 = vmatprep.subr.mxu0 0.0
      %1046 = vmatpush1.msra.mxu0 %v964
      %1047 = vmatprep.subr.mxu0 0.0
      %1048 = vmatpush1.msra.mxu0 %v963
      %1049 = vmatprep.subr.mxu0 0.0
      %1050 = vmatpush1.msra.mxu0 %v962
      %1051 = vmatprep.subr.mxu0 0.0
      %1052 = vmatpush1.msra.mxu0 %v961
      %1053 = vmatprep.subr.mxu0 0.0
      %1054 = vmatpush2.msra.mxu0 0.0
      %1055 = vmatprep.subr.mxu0 0.0
      %1056 = vmatpush2.msra.mxu0 0.0
      %1057 = vmatprep.subr.mxu0 0.0
      %1058 = vmatpush2.msra.mxu0 0.0
      %1059 = vmatprep.subr.mxu0 0.0
      %1060 = vmatpush2.msra.mxu0 0.0
      %1061 = vmatprep.subr.mxu0 0.0
      %1062 = vmatpush2.msra.mxu0 0.0
      %1063 = vmatprep.subr.mxu0 0.0
      %1064 = vmatpush2.msra.mxu0 0.0
      %1065 = vmatprep.subr.mxu0 0.0
      %1066 = vmatpush2.msra.mxu0 0.0
      %1067 = vmatprep.subr.mxu0 0.0
      %1068 = vmatpush2.msra.mxu0 0.0
      %1069 = vmatprep.subr.mxu0 0.0
      %1070 = vmatpush2.msra.mxu0 0.0
      %1071 = vmatprep.subr.mxu0 0.0
      %1072 = vmatpush2.msra.mxu0 0.0
      %1073 = vmatprep.subr.mxu0 0.0
      %1074 = vmatpush2.msra.mxu0 0.0
      %1075 = vmatprep.subr.mxu0 0.0
      %1076 = vmatpush2.msra.mxu0 0.0
      %1077 = vmatprep.subr.mxu0 0.0
      %1078 = vmatpush2.msra.mxu0 0.0
      %1079 = vmatprep.subr.mxu0 0.0
      %1080 = vmatpush2.msra.mxu0 0.0
      %1081 = vmatprep.subr.mxu0 0.0
      %1082 = vmatpush2.msra.mxu0 0.0
      %1083 = vmatprep.subr.mxu0 0.0
      %1084 = vmatpush2.msra.mxu0 0.0
      %1085 = vmatprep.mubr.f32.mxu0 0.0
      %1086 = vmatmul.mubr.f32.gmra.mxu0 %v974
      %v1087 = vpop.f32.mrf.mxu0
      %v1088 = vadd.f32 %v971, %v1087
      %v1089 = vpop.f32.mrf.mxu0
      %1090 = vmatprep.mubr.f32.mxu0 0.0
      %1091 = vmatmul.mubr.f32.gmra.mxu0 %v977
      %v1092 = vpop.f32.mrf.mxu0
      %v1093 = vadd.f32 %v971, %v1092
      %v1094 = vpop.f32.mrf.mxu0
      %1095 = vmatprep.mubr.f32.mxu0 0.0
      %1096 = vmatmul.mubr.f32.gmra.mxu0 %v980
      %v1097 = vpop.f32.mrf.mxu0
      %v1098 = vadd.f32 %v971, %v1097
      %v1099 = vpop.f32.mrf.mxu0
      %1100 = vmatprep.mubr.f32.mxu0 0.0
      %1101 = vmatmul.mubr.f32.gmra.mxu0 %v983
      %v1102 = vpop.f32.mrf.mxu0
      %v1103 = vadd.f32 %v971, %v1102
      %v1104 = vpop.f32.mrf.mxu0
      %1105 = vmatprep.mubr.f32.mxu0 0.0
      %1106 = vmatmul.mubr.f32.gmra.mxu0 %v986
      %v1107 = vpop.f32.mrf.mxu0
      %v1108 = vadd.f32 %v971, %v1107
      %v1109 = vpop.f32.mrf.mxu0
      %1110 = vmatprep.mubr.f32.mxu0 0.0
      %1111 = vmatmul.mubr.f32.gmra.mxu0 %v989
      %v1112 = vpop.f32.mrf.mxu0
      %v1113 = vadd.f32 %v971, %v1112
      %v1114 = vpop.f32.mrf.mxu0
      %1115 = vmatprep.mubr.f32.mxu0 0.0
      %1116 = vmatmul.mubr.f32.gmra.mxu0 %v992
      %v1117 = vpop.f32.mrf.mxu0
      %v1118 = vadd.f32 %v971, %v1117
      %v1119 = vpop.f32.mrf.mxu0
      %1120 = vmatprep.mubr.f32.mxu0 0.0
      %1121 = vmatmul.mubr.f32.gmra.mxu0 %v995
      %v1122 = vpop.f32.mrf.mxu0
      %v1123 = vadd.f32 %v971, %v1122
      %v1124 = vpop.f32.mrf.mxu0
      %1125 = vmatprep.mubr.f32.mxu0 0.0
      %1126 = vmatmul.mubr.f32.gmra.mxu0 %v998
      %v1127 = vpop.f32.mrf.mxu0
      %v1128 = vadd.f32 %v971, %v1127
      %v1129 = vpop.f32.mrf.mxu0
      %1130 = vmatprep.mubr.f32.mxu0 0.0
      %1131 = vmatmul.mubr.f32.gmra.mxu0 %v1001
      %v1132 = vpop.f32.mrf.mxu0
      %v1133 = vadd.f32 %v971, %v1132
      %v1134 = vpop.f32.mrf.mxu0
      %1135 = vmatprep.mubr.f32.mxu0 0.0
      %1136 = vmatmul.mubr.f32.gmra.mxu0 %v1004
      %v1137 = vpop.f32.mrf.mxu0
      %v1138 = vadd.f32 %v971, %v1137
      %v1139 = vpop.f32.mrf.mxu0
      %1140 = vmatprep.mubr.f32.mxu0 0.0
      %1141 = vmatmul.mubr.f32.gmra.mxu0 %v1007
      %v1142 = vpop.f32.mrf.mxu0
      %v1143 = vadd.f32 %v971, %v1142
      %v1144 = vpop.f32.mrf.mxu0
      %1145 = vmatprep.mubr.f32.mxu0 0.0
      %1146 = vmatmul.mubr.f32.gmra.mxu0 %v1010
      %v1147 = vpop.f32.mrf.mxu0
      %v1148 = vadd.f32 %v971, %v1147
      %v1149 = vpop.f32.mrf.mxu0
      %1150 = vmatprep.mubr.f32.mxu0 0.0
      %1151 = vmatmul.mubr.f32.gmra.mxu0 %v1013
      %v1152 = vpop.f32.mrf.mxu0
      %v1153 = vadd.f32 %v971, %v1152
      %v1154 = vpop.f32.mrf.mxu0
      %1155 = vmatprep.mubr.f32.mxu0 0.0
      %1156 = vmatmul.mubr.f32.gmra.mxu0 %v1016
      %v1157 = vpop.f32.mrf.mxu0
      %v1158 = vadd.f32 %v971, %v1157
      %v1159 = vpop.f32.mrf.mxu0
      %1160 = vmatprep.mubr.f32.mxu0 0.0
      %1161 = vmatmul.mubr.f32.gmra.mxu0 %v1019
      %v1162 = vpop.f32.mrf.mxu0
      %v1163 = vadd.f32 %v971, %v1162
      %v1164 = vpop.f32.mrf.mxu0
      %1165 = vdwg.mxu0
      %v1166 = vmax.f32 %v1088, 0.0
      %v1167 = vmax.f32 %v1093, 0.0
      %v1168 = vmax.f32 %v1098, 0.0
      %v1169 = vmax.f32 %v1103, 0.0
      %v1170 = vmax.f32 %v1108, 0.0
      %v1171 = vmax.f32 %v1113, 0.0
      %v1172 = vmax.f32 %v1118, 0.0
      %v1173 = vmax.f32 %v1123, 0.0
      %v1174 = vmax.f32 %v1128, 0.0
      %v1175 = vmax.f32 %v1133, 0.0
      %v1176 = vmax.f32 %v1138, 0.0
      %v1177 = vmax.f32 %v1143, 0.0
      %v1178 = vmax.f32 %v1148, 0.0
      %v1179 = vmax.f32 %v1153, 0.0
      %v1180 = vmax.f32 %v1158, 0.0
      %v1181 = vmax.f32 %v1163, 0.0
      %v1182 = vld [vmem:[%s5] sm:$0xff]
      %v1183 = vld [vmem:[%s5 + $0x8] sm:$0xff]
      %v1184 = vld [vmem:[%s5 + $0x10] sm:$0xff]
      %v1185 = vld [vmem:[%s5 + $0x18] sm:$0xff]
      %v1186 = vld [vmem:[%s6] sm:$0x1]
      %v1188 = vlaneseq
      %v1189 = vshrl.u32 %v1188, 7
      %v1190 = vsub.s32 0, %v1189
      %v1191 = vrot.slane %v1186, %v1190
      %v1194 = vsel %vm528, %v1166, 0
      %v1197 = vsel %vm528, %v1167, 0
      %v1200 = vsel %vm528, %v1168, 0
      %v1203 = vsel %vm528, %v1169, 0
      %v1206 = vsel %vm528, %v1170, 0
      %v1209 = vsel %vm528, %v1171, 0
      %v1212 = vsel %vm528, %v1172, 0
      %v1215 = vsel %vm528, %v1173, 0
      %v1218 = vsel %vm528, %v1174, 0
      %v1221 = vsel %vm528, %v1175, 0
      %v1224 = vsel %vm528, %v1176, 0
      %v1227 = vsel %vm528, %v1177, 0
      %v1230 = vsel %vm528, %v1178, 0
      %v1233 = vsel %vm528, %v1179, 0
      %v1236 = vsel %vm528, %v1180, 0
      %v1239 = vsel %vm528, %v1181, 0
      %1241 = vmatprep.subr.mxu0 0.0
      %1242 = vmatpush1.msra.mxu0 0.0
      %1243 = vmatprep.subr.mxu0 0.0
      %1244 = vmatpush1.msra.mxu0 0.0
      %1245 = vmatprep.subr.mxu0 0.0
      %1246 = vmatpush1.msra.mxu0 0.0
      %1247 = vmatprep.subr.mxu0 0.0
      %1248 = vmatpush1.msra.mxu0 0.0
      %1249 = vmatprep.subr.mxu0 0.0
      %1250 = vmatpush1.msra.mxu0 0.0
      %1251 = vmatprep.subr.mxu0 0.0
      %1252 = vmatpush1.msra.mxu0 0.0
      %1253 = vmatprep.subr.mxu0 0.0
      %1254 = vmatpush1.msra.mxu0 0.0
      %1255 = vmatprep.subr.mxu0 0.0
      %1256 = vmatpush1.msra.mxu0 0.0
      %1257 = vmatprep.subr.mxu0 0.0
      %1258 = vmatpush1.msra.mxu0 0.0
      %1259 = vmatprep.subr.mxu0 0.0
      %1260 = vmatpush1.msra.mxu0 0.0
      %1261 = vmatprep.subr.mxu0 0.0
      %1262 = vmatpush1.msra.mxu0 0.0
      %1263 = vmatprep.subr.mxu0 0.0
      %1264 = vmatpush1.msra.mxu0 0.0
      %1265 = vmatprep.subr.mxu0 0.0
      %1266 = vmatpush1.msra.mxu0 %v1185
      %1267 = vmatprep.subr.mxu0 0.0
      %1268 = vmatpush1.msra.mxu0 %v1184
      %1269 = vmatprep.subr.mxu0 0.0
      %1270 = vmatpush1.msra.mxu0 %v1183
      %1271 = vmatprep.subr.mxu0 0.0
      %1272 = vmatpush1.msra.mxu0 %v1182
      %1273 = vmatprep.subr.mxu0 0.0
      %1274 = vmatpush2.msra.mxu0 0.0
      %1275 = vmatprep.subr.mxu0 0.0
      %1276 = vmatpush2.msra.mxu0 0.0
      %1277 = vmatprep.subr.mxu0 0.0
      %1278 = vmatpush2.msra.mxu0 0.0
      %1279 = vmatprep.subr.mxu0 0.0
      %1280 = vmatpush2.msra.mxu0 0.0
      %1281 = vmatprep.subr.mxu0 0.0
      %1282 = vmatpush2.msra.mxu0 0.0
      %1283 = vmatprep.subr.mxu0 0.0
      %1284 = vmatpush2.msra.mxu0 0.0
      %1285 = vmatprep.subr.mxu0 0.0
      %1286 = vmatpush2.msra.mxu0 0.0
      %1287 = vmatprep.subr.mxu0 0.0
      %1288 = vmatpush2.msra.mxu0 0.0
      %1289 = vmatprep.subr.mxu0 0.0
      %1290 = vmatpush2.msra.mxu0 0.0
      %1291 = vmatprep.subr.mxu0 0.0
      %1292 = vmatpush2.msra.mxu0 0.0
      %1293 = vmatprep.subr.mxu0 0.0
      %1294 = vmatpush2.msra.mxu0 0.0
      %1295 = vmatprep.subr.mxu0 0.0
      %1296 = vmatpush2.msra.mxu0 0.0
      %1297 = vmatprep.subr.mxu0 0.0
      %1298 = vmatpush2.msra.mxu0 0.0
      %1299 = vmatprep.subr.mxu0 0.0
      %1300 = vmatpush2.msra.mxu0 0.0
      %1301 = vmatprep.subr.mxu0 0.0
      %1302 = vmatpush2.msra.mxu0 0.0
      %1303 = vmatprep.subr.mxu0 0.0
      %1304 = vmatpush2.msra.mxu0 0.0
      %1305 = vmatprep.mubr.f32.mxu0 0.0
      %1306 = vmatmul.mubr.f32.gmra.mxu0 %v1194
      %v1307 = vpop.f32.mrf.mxu0
      %v1308 = vadd.f32 %v1191, %v1307
      %v1309 = vpop.f32.mrf.mxu0
      %1310 = vmatprep.mubr.f32.mxu0 0.0
      %1311 = vmatmul.mubr.f32.gmra.mxu0 %v1197
      %v1312 = vpop.f32.mrf.mxu0
      %v1313 = vadd.f32 %v1191, %v1312
      %v1314 = vpop.f32.mrf.mxu0
      %1315 = vmatprep.mubr.f32.mxu0 0.0
      %1316 = vmatmul.mubr.f32.gmra.mxu0 %v1200
      %v1317 = vpop.f32.mrf.mxu0
      %v1318 = vadd.f32 %v1191, %v1317
      %v1319 = vpop.f32.mrf.mxu0
      %1320 = vmatprep.mubr.f32.mxu0 0.0
      %1321 = vmatmul.mubr.f32.gmra.mxu0 %v1203
      %v1322 = vpop.f32.mrf.mxu0
      %v1323 = vadd.f32 %v1191, %v1322
      %v1324 = vpop.f32.mrf.mxu0
      %1325 = vmatprep.mubr.f32.mxu0 0.0
      %1326 = vmatmul.mubr.f32.gmra.mxu0 %v1206
      %v1327 = vpop.f32.mrf.mxu0
      %v1328 = vadd.f32 %v1191, %v1327
      %v1329 = vpop.f32.mrf.mxu0
      %1330 = vmatprep.mubr.f32.mxu0 0.0
      %1331 = vmatmul.mubr.f32.gmra.mxu0 %v1209
      %v1332 = vpop.f32.mrf.mxu0
      %v1333 = vadd.f32 %v1191, %v1332
      %v1334 = vpop.f32.mrf.mxu0
      %1335 = vmatprep.mubr.f32.mxu0 0.0
      %1336 = vmatmul.mubr.f32.gmra.mxu0 %v1212
      %v1337 = vpop.f32.mrf.mxu0
      %v1338 = vadd.f32 %v1191, %v1337
      %v1339 = vpop.f32.mrf.mxu0
      %1340 = vmatprep.mubr.f32.mxu0 0.0
      %1341 = vmatmul.mubr.f32.gmra.mxu0 %v1215
      %v1342 = vpop.f32.mrf.mxu0
      %v1343 = vadd.f32 %v1191, %v1342
      %v1344 = vpop.f32.mrf.mxu0
      %1345 = vmatprep.mubr.f32.mxu0 0.0
      %1346 = vmatmul.mubr.f32.gmra.mxu0 %v1218
      %v1347 = vpop.f32.mrf.mxu0
      %v1348 = vadd.f32 %v1191, %v1347
      %v1349 = vpop.f32.mrf.mxu0
      %1350 = vmatprep.mubr.f32.mxu0 0.0
      %1351 = vmatmul.mubr.f32.gmra.mxu0 %v1221
      %v1352 = vpop.f32.mrf.mxu0
      %v1353 = vadd.f32 %v1191, %v1352
      %v1354 = vpop.f32.mrf.mxu0
      %1355 = vmatprep.mubr.f32.mxu0 0.0
      %1356 = vmatmul.mubr.f32.gmra.mxu0 %v1224
      %v1357 = vpop.f32.mrf.mxu0
      %v1358 = vadd.f32 %v1191, %v1357
      %v1359 = vpop.f32.mrf.mxu0
      %1360 = vmatprep.mubr.f32.mxu0 0.0
      %1361 = vmatmul.mubr.f32.gmra.mxu0 %v1227
      %v1362 = vpop.f32.mrf.mxu0
      %v1363 = vadd.f32 %v1191, %v1362
      %v1364 = vpop.f32.mrf.mxu0
      %1365 = vmatprep.mubr.f32.mxu0 0.0
      %1366 = vmatmul.mubr.f32.gmra.mxu0 %v1230
      %v1367 = vpop.f32.mrf.mxu0
      %v1368 = vadd.f32 %v1191, %v1367
      %v1369 = vpop.f32.mrf.mxu0
      %1370 = vmatprep.mubr.f32.mxu0 0.0
      %1371 = vmatmul.mubr.f32.gmra.mxu0 %v1233
      %v1372 = vpop.f32.mrf.mxu0
      %v1373 = vadd.f32 %v1191, %v1372
      %v1374 = vpop.f32.mrf.mxu0
      %1375 = vmatprep.mubr.f32.mxu0 0.0
      %1376 = vmatmul.mubr.f32.gmra.mxu0 %v1236
      %v1377 = vpop.f32.mrf.mxu0
      %v1378 = vadd.f32 %v1191, %v1377
      %v1379 = vpop.f32.mrf.mxu0
      %1380 = vmatprep.mubr.f32.mxu0 0.0
      %1381 = vmatmul.mubr.f32.gmra.mxu0 %v1239
      %v1382 = vpop.f32.mrf.mxu0
      %v1383 = vadd.f32 %v1191, %v1382
      %v1384 = vpop.f32.mrf.mxu0
      %1385 = vdwg.mxu0
      %vm1386 = vcmask 138240
      %1387 = vst.msk [vmem:[%s280] sm:$0xff] %vm1386, %v1308
      %1388 = vst.msk [vmem:[%s280 + $0x8] sm:$0xff] %vm1386, %v1313
      %1389 = vst.msk [vmem:[%s280 + $0x10] sm:$0xff] %vm1386, %v1318
      %1390 = vst.msk [vmem:[%s280 + $0x18] sm:$0xff] %vm1386, %v1323
      %1391 = vst.msk [vmem:[%s280 + $0x20] sm:$0xff] %vm1386, %v1328
      %1392 = vst.msk [vmem:[%s280 + $0x28] sm:$0xff] %vm1386, %v1333
      %1393 = vst.msk [vmem:[%s280 + $0x30] sm:$0xff] %vm1386, %v1338
      %1394 = vst.msk [vmem:[%s280 + $0x38] sm:$0xff] %vm1386, %v1343
      %1395 = vst.msk [vmem:[%s280 + $0x40] sm:$0xff] %vm1386, %v1348
      %1396 = vst.msk [vmem:[%s280 + $0x48] sm:$0xff] %vm1386, %v1353
      %1397 = vst.msk [vmem:[%s280 + $0x50] sm:$0xff] %vm1386, %v1358
      %1398 = vst.msk [vmem:[%s280 + $0x58] sm:$0xff] %vm1386, %v1363
      %1399 = vst.msk [vmem:[%s280 + $0x60] sm:$0xff] %vm1386, %v1368
      %1400 = vst.msk [vmem:[%s280 + $0x68] sm:$0xff] %vm1386, %v1373
      %1401 = vst.msk [vmem:[%s280 + $0x70] sm:$0xff] %vm1386, %v1378
      %1402 = vst.msk [vmem:[%s280 + $0x78] sm:$0xff] %vm1386, %v1383
      %s1403 = smul.u32 16, %s18
      %p1404 = scmp.lt.s32.totalorder %s1403, 31
      %s1405 = scalar_select %p1404, %s1403, 31
      %s1406 = smul.addr %s1405, 8
      %s1407 = scalar_lea.vmem %s7, %s1406
      // Predicated region
      $region49: #{tpu_custom_call.1} parent=47 // pred_check
        %p1408 = pneg %p188
      $region50: #{tpu_custom_call.1} parent=47 // pred_check_branch
        %1410 = sbr.rel (%p1408) target = $region52
      $region51: #{tpu_custom_call.1} parent=47 // pred_region
        %s1411 = smul.u32 16, %s18
      $region52: #{tpu_custom_call.1} parent=47 // pred_fallthru
        _
    $region48: #{tpu_custom_call.1} parent=5 // pred_fallthru
      _
    %p1412 = scmp.le.s32.totalorder 2, %s13
    // Predicated region
    $region53: #{tpu_custom_call.1} parent=5 // pred_check
      %p1413 = pneg %p1412
    $region54: #{tpu_custom_call.1} parent=5 // pred_check_branch
      %1415 = sbr.rel (%p1413) target = $region56
    $region55: #{tpu_custom_call.1} parent=5 // pred_region
      %s1416 = ssub.s32 %s13, 2
      // Predicated region
      $region57: #{tpu_custom_call.1} parent=55 // pred_check
        %p1417 = pneg %p194
      $region58: #{tpu_custom_call.1} parent=55 // pred_check_branch
        %1419 = sbr.rel (%p1417) target = $region60
      $region59: #{tpu_custom_call.1} parent=55 // pred_region
        %s1420 = smul.u32 16, %s19
        %p1421 = scmp.lt.s32.totalorder %s1420, 31
        %s1422 = scalar_select %p1421, %s1420, 31
        %s1423 = smul.addr %s1422, 8
        %s1424 = scalar_lea.vmem %s7, %s1423
      $region60: #{tpu_custom_call.1} parent=55 // pred_fallthru
        _
    $region56: #{tpu_custom_call.1} parent=5 // pred_fallthru
      _
  $region6: #{tpu_custom_call.1} parent=0 // loop_footer
    %s17 = sadd.s32 1, %s13
  $region7: #{tpu_custom_call.1} parent=0 // loop_footer_branch
    %12 = sbr.rel target = $region3
  $region8: #{tpu_custom_call.1} parent=0 // loop_exit
    _

</llo_original>
